<compile_context>
chip_gen: v6e
topology: v6e:2x2x1
jax: 0.10.0
libtpu: 0.0.40
codegen_flags: <defaults>
</compile_context>

<pallas_src>
import functools

import jax
import jax.numpy as jnp
from jax.experimental import pallas as pl
from jax.experimental.pallas import tpu as pltpu

_LANE = 128
_SUBLANE = 8
_MAX_COLS = 2048
_MIB = 1024 * 1024


def _clipped_relu_kernel(x_ref, o_ref, *, max_value):
    # Trivial VPU body; the kernel is memory bound, keep it simple.
    o_ref[...] = jnp.clip(x_ref[...], 0.0, max_value).astype(o_ref.dtype)


def _round_up(x, m):
    return ((x + m - 1) // m) * m


@functools.lru_cache(maxsize=None)
def _hw_config():
    """(target_block_bytes, vmem_limit_bytes, num_tensorcores) for this chip.

    Resident footprint is ~4x the block (double-buffered in + out), so the
    block target keeps that comfortably inside an explicit scoped-VMEM limit,
    which in turn stays well inside physical VMEM (v5e/v6e 128 MiB, v7x 64 MiB
    per TensorCore).
    """
    kind = ""
    try:
        kind = jax.devices()[0].device_kind.lower()
    except Exception:
        pass
    vmem = None
    try:
        vmem = int(pltpu.get_tpu_info().vmem_capacity_bytes)
    except Exception:
        vmem = None

    if vmem is not None and vmem <= 64 * _MIB:
        # v7x-like: 64 MiB VMEM/TC, 2 TCs, ~3.2 TB/s HBM. Big-ish blocks but
        # well inside the smaller VMEM; even block counts so both cores work.
        return 4 * _MIB, 32 * _MIB, 2
    if "v7" in kind:
        return 4 * _MIB, 32 * _MIB, 2
    if "v5e" in kind or "v5 lite" in kind or "v5lite" in kind:
        # v5e: single TC, 128 MiB physical VMEM but only a 16 MiB scoped
        # default -- raise the limit explicitly and use ~4 MiB blocks.
        return 4 * _MIB, 32 * _MIB, 1
    if "v4" in kind or "v5p" in kind or kind.rstrip().endswith("v5"):
        # Megacore parts: 128 MiB VMEM, 2 TensorCores.
        return 8 * _MIB, 64 * _MIB, 2
    if vmem is not None or "v6" in kind:
        # v6e: single TC, 128 MiB VMEM -- biggest block worth having.
        return 8 * _MIB, 64 * _MIB, 1
    # Unknown backend (e.g. interpret mode): conservative defaults.
    return 2 * _MIB, 32 * _MIB, 2


def _choose_tile_rows(rows, bytes_per_row, block_bytes, sublane_group, num_tc):
    """Row-block size: big (amortize ~0.35us/step), sublane-group aligned,
    and on 2-TC parts an even number of balanced blocks."""
    if rows <= sublane_group:
        return rows                       # single full-extent block
    rows_cap = _round_up(rows, sublane_group)
    per_block = max(sublane_group,
                    (block_bytes // bytes_per_row) // sublane_group * sublane_group)
    if num_tc <= 1:
        # Single TensorCore: the grid is a serial loop -> take the biggest
        # block within budget; forced splitting is pure per-step overhead.
        return min(per_block, rows_cap)
    # Multi-TC (v7x / megacore): even number of near-equal blocks so both
    # TensorCores get balanced work, each block still within budget.
    nblocks = max(2, -(-rows // per_block))
    if nblocks % 2:
        nblocks += 1
    tile_rows = min(_round_up(-(-rows // nblocks), sublane_group), rows_cap)
    # Rounding can change the block count; one refinement pass.
    grid = -(-rows // tile_rows)
    if grid > 1 and grid % 2:
        tile_rows = min(_round_up(-(-rows // (grid + 1)), sublane_group), rows_cap)
    return tile_rows


def clipped_relu(x, max_value=1.0, *, donate_input=False,
                 min_pallas_bytes=64 * 1024, _block_bytes=None):
    """Elementwise ClippedReLU (clamp to [0, max_value]) via Pallas.

    Any shape, any float dtype. donate_input=True aliases the output onto the
    input HBM buffer (only when the caller no longer needs `x`; no effect on
    the jnp fallback paths).
    """
    orig_shape = x.shape
    dtype = x.dtype
    n = x.size
    if n == 0:
        return x
    itemsize = jnp.dtype(dtype).itemsize

    # Tiny inputs: fixed launch + pipeline-prologue cost exceeds the op.
    # Non-128-divisible totals: the Pallas path would need pad+slice (or a
    # bulk/tail stitch) == 2-3x the ideal HBM traffic; the fused XLA clamp is
    # already at the roofline with zero extra copies.
    # TODO(synk): zero-copy ragged-tail Pallas variant via pl.ANY refs + manual
    # masked DMA of the final partial chunk.
    if n % _LANE != 0 or n * itemsize < min_pallas_bytes:
        return jnp.clip(x, 0.0, max_value)

    block_bytes, vmem_limit, num_tc = _hw_config()
    if _block_bytes is not None:
        block_bytes = _block_bytes

    # Widest lane-dense column count (any multiple of 128) dividing n: the
    # reshape is free and every store is an unmasked full-lane vst.
    cols = _LANE
    for c in range(_MAX_COLS, _LANE - 1, -_LANE):
        if n % c == 0:
            cols = c
            break
    rows = n // cols
    x2d = jnp.reshape(x, (rows, cols))

    # Sub-32-bit dtypes pack rows along sublanes; keep block edges on the
    # packed group (8 f32 / 16 bf16 / 32 int8-fp8 rows).
    sublane_group = _SUBLANE * max(1, 4 // itemsize)
    tile_rows = _choose_tile_rows(rows, cols * itemsize, block_bytes,
                                  sublane_group, num_tc)
    grid = (pl.cdiv(rows, tile_rows),)

    out2d = pl.pallas_call(
        functools.partial(_clipped_relu_kernel, max_value=max_value),
        out_shape=jax.ShapeDtypeStruct((rows, cols), dtype),
        grid_spec=pltpu.PrefetchScalarGridSpec(
            num_scalar_prefetch=0,
            grid=grid,
            in_specs=[pl.BlockSpec((tile_rows, cols), lambda i: (i, 0))],
            out_specs=pl.BlockSpec((tile_rows, cols), lambda i: (i, 0)),
        ),
        compiler_params=pltpu.CompilerParams(
            # "parallel" lets multi-TC parts shard the 1-D stream; it is
            # neutral (not harmful) on single-TC v5e/v6e.
            # TODO(synk): verify v7x actually shards; fall back to CORE_PARALLEL if not.
            dimension_semantics=("parallel",),
            vmem_limit_bytes=vmem_limit,
        ),
        cost_estimate=pl.CostEstimate(
            flops=2 * n, transcendentals=0, bytes_accessed=2 * n * itemsize),
        input_output_aliases=({0: 0} if donate_input else {}),
    )(x2d)

    return jnp.reshape(out2d, orig_shape)


if __name__ == "__main__":
    key = jax.random.PRNGKey(0)
    max_value = 1.0

    def ref(v):
        return jnp.clip(v, 0.0, max_value)

    # 1) Small NCHW feature map: routed through the tiny-input bypass.
    x = jax.random.normal(key, (2, 4, 16, 16), dtype=jnp.float32) * 2.0
    y = jax.block_until_ready(clipped_relu(x, max_value=max_value))
    assert y.shape == x.shape and y.dtype == x.dtype
    assert jnp.allclose(y, ref(x)), "small f32 mismatch"

    # 2) Same small input forced through the Pallas path.
    y_forced = jax.block_until_ready(
        clipped_relu(x, max_value=max_value, min_pallas_bytes=0))
    assert jnp.allclose(y_forced, ref(x)), "forced Pallas path mismatch"

    # 3) Medium feature map on the default Pallas path; a small block override
    #    forces a multi-step grid so BlockSpec pipelining is exercised.
    xm = jax.random.normal(key, (2, 8, 64, 64), dtype=jnp.float32) * 2.0
    ym = jax.block_until_ready(clipped_relu(xm, max_value=max_value))
    assert jnp.allclose(ym, ref(xm)), "medium f32 mismatch"
    ym_multi = jax.block_until_ready(
        clipped_relu(xm, max_value=max_value, _block_bytes=64 * 1024))
    assert jnp.allclose(ym_multi, ref(xm)), "multi-block grid mismatch"

    # 4) bf16 stays bf16 (16-row sublane-group alignment path).
    xb = xm.astype(jnp.bfloat16)
    yb = jax.block_until_ready(clipped_relu(xb, max_value=max_value))
    assert yb.dtype == jnp.bfloat16
    assert jnp.allclose(yb.astype(jnp.float32),
                        ref(xb).astype(jnp.float32)), "bf16 mismatch"

    # 5) Ragged / non-128-divisible total -> fused XLA clamp fallback.
    xo = jax.random.normal(key, (2, 4, 17, 17), dtype=jnp.float32) * 2.0
    yo = jax.block_until_ready(clipped_relu(xo, max_value=max_value))
    assert jnp.allclose(yo, ref(xo)), "ragged fallback mismatch"

    print("KERNEL_OK")
</pallas_src>

<mosaic_0001>
module attributes {stable_mosaic.version = 11 : i64} {
  func.func @_clipped_relu_kernel(%arg0: i32, %arg1: memref<1x2048xf32, #tpu.memory_space<vmem>>, %arg2: memref<1x2048xf32, #tpu.memory_space<vmem>>) attributes {dimension_semantics = [#tpu.dimension_semantics<parallel>], iteration_bounds = array<i64: 1>, scalar_prefetch = 0 : i64, scratch_operands = 0 : i64, tpu.core_type = #tpu.core_type<tc>, window_params = [{transform_indices = @transform_0, window_bounds = array<i64: 1, 2048>}, {transform_indices = @transform_1, window_bounds = array<i64: 1, 2048>}]} {
    %c0 = arith.constant 0 : index
    %c0_0 = arith.constant 0 : index
    %0 = vector.load %arg1[%c0, %c0_0] : memref<1x2048xf32, #tpu.memory_space<vmem>>, vector<1x2048xf32>
    %cst = arith.constant 0.000000e+00 : f32
    %cst_1 = arith.constant 1.000000e+00 : f32
    %1 = vector.broadcast %cst : f32 to vector<1x2048xf32>
    %2 = arith.maximumf %1, %0 : vector<1x2048xf32>
    %3 = vector.broadcast %cst_1 : f32 to vector<1x2048xf32>
    %4 = arith.minimumf %3, %2 : vector<1x2048xf32>
    %c0_2 = arith.constant 0 : index
    %c0_3 = arith.constant 0 : index
    %5 = vector.load %arg2[%c0_2, %c0_3] : memref<1x2048xf32, #tpu.memory_space<vmem>>, vector<1x2048xf32>
    tpu.vector_store %arg2[%c0_2, %c0_3], %4 {strides = array<i32>} : memref<1x2048xf32, #tpu.memory_space<vmem>>, vector<1x2048xf32>,
    return
  }
  func.func @transform_0(%arg0: i32) -> (i32, i32) {
    %c0_i32 = arith.constant 0 : i32
    %c0_i32_0 = arith.constant 0 : i32
    return %arg0, %c0_i32 : i32, i32
  }
  func.func @transform_1(%arg0: i32) -> (i32, i32) {
    %c0_i32 = arith.constant 0 : i32
    %c0_i32_0 = arith.constant 0 : i32
    return %arg0, %c0_i32 : i32, i32
  }
}

</mosaic_0001>

<llo_original>
// kernel: tpu_custom_call.1
$region0: #{tpu_custom_call.1}
  #allocation0 [shape = 'u32[]', space=smem, size = 0x4, offset = 0x4, fixed_abs, tag = 'smem constant byte address 0x4 - core index']
  #allocation1 [shape = 'u32[144,128]{1,0:T(1,128)}', space=vmem, size = 0x12000, scoped, tag = 'internal scratch']
  %s0 = inlined_call_operand.hbm [shape: f32[1,2048], index: 0, kind: input, shape index: {}]
  %s1 = inlined_call_operand.hbm [shape: f32[1,2048], index: 1, kind: output, shape index: {}]
  %s2 = sld [smem:[#allocation0]]
  $region18: #{tpu_custom_call.1} parent=0
    _
  %s4 = ssub.s32 1, %s2
  %s5 = scalar_select 0, %s4, %s2
  $region1: #{tpu_custom_call.1} parent=0
    #allocation2 [shape = 'u8[8192]{0}', space=vmem, size = 0x2000, scoped, tag = 'input window, operand 0, single buffered']
    #allocation3 [shape = 's32[1]{0}', space=sflag, size = 0x4, scoped, tag = 'scoped memory for tpu_custom_call.1']
    #allocation4 [shape = 's32[1]{0}', space=sflag, size = 0x4, scoped, tag = 'scoped memory for tpu_custom_call.1']
    #allocation5 [shape = 'u8[8192]{0}', space=vmem, size = 0x2000, scoped, tag = 'output window, operand 0, single buffered']
    %6 = vsyncpa [#allocation3], 0
    %7 = vsyncpa [#allocation4], 0
    // Predicated region
    $region2: #{tpu_custom_call.1} parent=1 // pred_check
      _
    $region3: #{tpu_custom_call.1} parent=1 // pred_check_branch
      %9 = sbr.rel (0) target = $region5
    $region4: #{tpu_custom_call.1} parent=1 // pred_region
      %s11 = ssub.s32 256, 256
      %12 = vsyncadd [#allocation3], %s11
      %s14 = sshll.u32 [#allocation2], 4
      %s15 = int_to_ptr.vmem [resolvable:$true] %s14
      %17 = dma.hbm_to_vmem [thread:$0]  %s0, 256, %s15, [#allocation3]
    $region5: #{tpu_custom_call.1} parent=1 // pred_fallthru
      _
    // Predicated region
    $region6: #{tpu_custom_call.1} parent=1 // pred_check
      _
    $region7: #{tpu_custom_call.1} parent=1 // pred_check_branch
      %19 = sbr.rel (0) target = $region9
    $region8: #{tpu_custom_call.1} parent=1 // pred_region
      %20 = dma.done [#allocation3], 256
    $region9: #{tpu_custom_call.1} parent=1 // pred_fallthru
      _
    %v21 = vld [vmem:[#allocation2] sm:$0xff]
    %v22 = vld [vmem:[#allocation2 + $0x8] sm:$0xff]
    %v23 = vmax.f32 %v21, 0.0
    %v24 = vmax.f32 %v22, 0.0
    %v25 = vmin.f32 %v23, 1.0
    %v26 = vmin.f32 %v24, 1.0
    %27 = vst [vmem:[#allocation5] sm:$0xff] %v25
    %28 = vst [vmem:[#allocation5 + $0x8] sm:$0xff] %v26
    // Predicated region
    $region10: #{tpu_custom_call.1} parent=1 // pred_check
      _
    $region11: #{tpu_custom_call.1} parent=1 // pred_check_branch
      %30 = sbr.rel (0) target = $region13
    $region12: #{tpu_custom_call.1} parent=1 // pred_region
      %s32 = ssub.s32 256, 256
      %33 = vsyncadd [#allocation4], %s32
      %s35 = sshll.u32 [#allocation5], 4
      %s36 = int_to_ptr.vmem [resolvable:$true] %s35
      %38 = dma.vmem_to_hbm [thread:$0]  %s36, 256, %s1, [#allocation4]
    $region13: #{tpu_custom_call.1} parent=1 // pred_fallthru
      _
    // Predicated region
    $region14: #{tpu_custom_call.1} parent=1 // pred_check
      _
    $region15: #{tpu_custom_call.1} parent=1 // pred_check_branch
      %40 = sbr.rel (0) target = $region17
    $region16: #{tpu_custom_call.1} parent=1 // pred_region
      %41 = dma.done [#allocation4], 256
    $region17: #{tpu_custom_call.1} parent=1 // pred_fallthru
      _
    %42 = vsyncpa [#allocation3], 1
    %43 = vsyncpa [#allocation4], 1

</llo_original>
